<compile_context>
chip_gen: v5e
topology: v5e:2x2
jax: 0.10.0
libtpu: 0.0.40
codegen_flags: <defaults>
</compile_context>

<pallas_src>
import functools

import jax
import jax.numpy as jnp
from jax.experimental import pallas as pl
from jax.experimental.pallas import tpu as pltpu

_NEG = -1e30  # finite "minus infinity": avoids inf-inf NaNs in the online max


def _round_up(x, m):
    return ((x + m - 1) // m) * m


def _supcon_kernel(q_ref, kt_ref, qlc_ref, qlr_ref, t_ref, tl_ref,
                   m_out, s_out, p_out,
                   qs_sc, m_sc, s_sc, p_sc,
                   *, temp, q_valid, t_tile, tiles_per_core, mxu_dtype):
    core = pl.program_id(0)
    step = pl.program_id(1)
    n = q_ref.shape[0]

    # ---------------- step 0 (per core): scale query once, reset stats -------
    @pl.when(step == 0)
    def _init():
        q = q_ref[...].astype(jnp.float32)                         # (N, D)
        q_ss = jnp.sum(q * q, axis=-1, keepdims=True)              # (N, 1)
        # 1/max(||q||, 1e-4) with 1/temp folded in.
        inv_q = jax.lax.rsqrt(jnp.maximum(q_ss, 1e-8)) * (1.0 / temp)
        qs = q * inv_q
        qs_sc[...] = qs.astype(mxu_dtype)                          # cast once

        m_sc[...] = jnp.full((n, 1), _NEG, jnp.float32)
        s_sc[...] = jnp.zeros((n, 1), jnp.float32)
        p_sc[...] = jnp.zeros((n, 1), jnp.float32)

        # Keys block (tiny N x N) is folded on core 0 only; diagonal mask is
        # only ever built here.
        @pl.when(core == 0)
        def _keys():
            k32 = kt_ref[...].astype(jnp.float32)                  # (D, N)
            k_ss = jnp.sum(k32 * k32, axis=0, keepdims=True)       # (1, N)
            inv_k = jax.lax.rsqrt(jnp.maximum(k_ss, 1e-8))
            rawk = jax.lax.dot_general(
                qs, k32, (((1,), (0,)), ((), ())),
                preferred_element_type=jnp.float32) * inv_k        # (N, N)
            row = jax.lax.broadcasted_iota(jnp.int32, (n, n), 0)
            col = jax.lax.broadcasted_iota(jnp.int32, (n, n), 1)
            off_diag = row != col
            rawk_e = jnp.where(off_diag, rawk, _NEG)
            m0 = jnp.max(rawk_e, axis=-1, keepdims=True)
            m_sc[...] = m0
            s_sc[...] = jnp.sum(jnp.exp(rawk_e - m0), axis=-1, keepdims=True)
            posk = jnp.logical_and(qlc_ref[...] == qlr_ref[...], off_diag)
            p_sc[...] = jnp.sum(jnp.where(posk, rawk, 0.0),
                                axis=-1, keepdims=True)

    # ---------------- every step: fold one (D, T_TILE) queue tile ------------
    # TODO(synk): for large N (>= ~512) add an inner lax.fori_loop over N
    # chunks so the (N, T_TILE) temporaries stay within the vreg file.
    t = t_ref[...]                                                 # (D, T) mxu dtype
    t32 = t.astype(jnp.float32)
    t_ss = jnp.sum(t32 * t32, axis=0, keepdims=True)               # (1, T)
    inv_t = jax.lax.rsqrt(jnp.maximum(t_ss, 1e-8))
    raw = jax.lax.dot_general(                                     # (N, T) f32 acc
        qs_sc[...], t, (((1,), (0,)), ((), ())),
        preferred_element_type=jnp.float32) * inv_t                # defer norm

    col = (jax.lax.broadcasted_iota(jnp.int32, (1, t_tile), 1)
           + (core * tiles_per_core + step) * t_tile)
    valid = col < q_valid                                          # (1, T)
    raw_e = jnp.where(valid, raw, _NEG)

    m_old = m_sc[...]
    m_new = jnp.maximum(m_old, jnp.max(raw_e, axis=-1, keepdims=True))
    alpha = jnp.exp(m_old - m_new)
    s_sc[...] = alpha * s_sc[...] + jnp.sum(jnp.exp(raw_e - m_new),
                                            axis=-1, keepdims=True)
    m_sc[...] = m_new
    pos = jnp.logical_and(qlc_ref[...] == tl_ref[...], valid)      # (N, T)
    p_sc[...] = p_sc[...] + jnp.sum(jnp.where(pos, raw, 0.0),
                                    axis=-1, keepdims=True)

    # ---------------- last step: emit this core's partials -------------------
    @pl.when(step == pl.num_programs(1) - 1)
    def _fin():
        m_out[...] = m_sc[...]
        s_out[...] = s_sc[...]
        p_out[...] = p_sc[...]


def supcon_with_queue(query, keys, queue, query_labels, queue_labels,
                      temp=0.05, *, t_tile=None, mxu_dtype=jnp.bfloat16,
                      num_cores=None):
    """Pallas implementation of SupConWithQueue.forward. Returns a scalar loss."""
    n, d = query.shape
    assert keys.shape == (n, d)
    q_count = int(queue.shape[0])
    mxu_itemsize = jnp.dtype(mxu_dtype).itemsize

    # ---- VMEM budget (v7x: 64 MiB, v5e/v6e: 128 MiB) -----------------------
    try:
        vmem_cap = int(pltpu.get_tpu_info().vmem_capacity_bytes)
    except Exception:  # fall back to the most restrictive generation (v7x)
        vmem_cap = 64 << 20
    budget = int(vmem_cap * 0.70)

    # Bytes that do not scale with t_tile (double-buffered resident inputs +
    # scratch) and bytes per queue column (double-buffered queue tile, labels,
    # f32 temporaries).
    fixed = (2 * (n * d * query.dtype.itemsize + d * n * keys.dtype.itemsize
                  + 2 * n * 4)
             + n * d * mxu_itemsize + 3 * n * 4)
    per_col = 2 * d * mxu_itemsize + 2 * 4 + 2 * d * 4 + 6 * n * 4

    # ---- queue tile size: >= ~1 MiB per buffer, 128-lane multiple ----------
    if t_tile is None:
        t_tile = pl.cdiv(1 << 20, max(1, d * mxu_itemsize))
    t_tile = max(128, _round_up(int(t_tile), 128))
    t_tile = min(t_tile, _round_up(max(q_count, 1), 128))
    t_tile_cap = max(128, ((budget - fixed) // max(1, per_col)) // 128 * 128)
    t_tile = min(t_tile, t_tile_cap)

    tiles_real = pl.cdiv(max(q_count, 1), t_tile)
    if num_cores is None:
        # v7x megacore split of the queue axis; harmless (sequential) elsewhere.
        num_cores = 2 if tiles_real >= 2 else 1
    num_cores = max(1, min(int(num_cores), tiles_real))
    tiles_per_core = pl.cdiv(tiles_real, num_cores)
    # Re-derive so every core's first tile holds at least one real column
    # (keeps the online max well-defined without inf arithmetic).
    num_cores = pl.cdiv(tiles_real, tiles_per_core)
    q_pad = num_cores * tiles_per_core * t_tile

    ql = query_labels.astype(jnp.int32).reshape(n)
    tl = queue_labels.astype(jnp.int32).reshape(-1)

    # Queue streamed transposed (D, Q_pad) in the MXU dtype: lane-dense DMA
    # along the (large) queue axis, natural MXU form, half HBM bytes if bf16.
    queue_p = jnp.pad(queue, ((0, q_pad - q_count), (0, 0)))
    queue_t = queue_p.T.astype(mxu_dtype)                          # (D, Q_pad)
    tl_p = jnp.pad(tl, (0, q_pad - q_count)).reshape(1, q_pad)

    keys_t = keys.T                                                # (D, N) resident
    qlc = ql.reshape(n, 1)
    qlr = ql.reshape(1, n)

    # Positive counts depend only on labels: hoisted out of the kernel.
    cnt_keys = jnp.sum(ql[:, None] == ql[None, :], axis=1) - 1
    cnt_queue = (jnp.sum(ql[:, None] == tl[None, :], axis=1)
                 if q_count > 0 else jnp.zeros((n,), jnp.int32))
    cnt = (cnt_keys + cnt_queue).astype(jnp.float32)               # (N,)

    est = fixed + per_col * t_tile
    vmem_limit = int(max(32 << 20, min(int(vmem_cap * 0.9), est + (16 << 20))))

    kernel = functools.partial(
        _supcon_kernel, temp=float(temp), q_valid=q_count, t_tile=t_tile,
        tiles_per_core=tiles_per_core, mxu_dtype=mxu_dtype)

    part_shape = jax.ShapeDtypeStruct((num_cores, n, 1), jnp.float32)
    m_parts, s_parts, p_parts = pl.pallas_call(
        kernel,
        out_shape=(part_shape, part_shape, part_shape),
        grid_spec=pltpu.PrefetchScalarGridSpec(
            num_scalar_prefetch=0,
            grid=(num_cores, tiles_per_core),
            in_specs=[
                pl.BlockSpec((n, d), lambda c, k: (0, 0)),          # query (resident)
                pl.BlockSpec((d, n), lambda c, k: (0, 0)),          # keys^T (resident)
                pl.BlockSpec((n, 1), lambda c, k: (0, 0)),          # query labels (col)
                pl.BlockSpec((1, n), lambda c, k: (0, 0)),          # query labels (row)
                pl.BlockSpec((d, t_tile),
                             lambda c, k: (0, c * tiles_per_core + k)),  # queue^T tile
                pl.BlockSpec((1, t_tile),
                             lambda c, k: (0, c * tiles_per_core + k)),  # queue labels
            ],
            out_specs=(
                pl.BlockSpec((None, n, 1), lambda c, k: (c, 0, 0)),  # m partials
                pl.BlockSpec((None, n, 1), lambda c, k: (c, 0, 0)),  # s partials
                pl.BlockSpec((None, n, 1), lambda c, k: (c, 0, 0)),  # p partials
            ),
            scratch_shapes=[
                pltpu.VMEM((n, d), mxu_dtype),    # pre-scaled query (cast once)
                pltpu.VMEM((n, 1), jnp.float32),  # running max m
                pltpu.VMEM((n, 1), jnp.float32),  # running exp-sum s
                pltpu.VMEM((n, 1), jnp.float32),  # sum of positive raw logits p
            ],
        ),
        compiler_params=pltpu.CompilerParams(
            dimension_semantics=("parallel", "arbitrary"),
            vmem_limit_bytes=vmem_limit),
    )(query, keys_t, qlc, qlr, queue_t, tl_p)

    # Tiny epilogue: merge per-core online-softmax partials, apply 1/count, mean.
    m_parts = m_parts[..., 0]                                      # (C, N)
    s_parts = s_parts[..., 0]
    p_parts = p_parts[..., 0]
    m = jnp.max(m_parts, axis=0)                                   # (N,)
    s = jnp.sum(s_parts * jnp.exp(m_parts - m[None, :]), axis=0)
    lse = jnp.log(s) + m
    p = jnp.sum(p_parts, axis=0)
    # NOTE: rows with zero positives give cnt == 0 -> NaN (matches PyTorch).
    loss_rows = lse - p / cnt
    return jnp.mean(loss_rows)


def supcon_with_queue_ref(query, keys, queue, query_labels, queue_labels, temp=0.05):
    """Pure-JAX reference mirroring the PyTorch forward exactly."""
    targets = jnp.concatenate([keys, queue], axis=0)
    target_labels = jnp.concatenate([query_labels, queue_labels], axis=0)
    qn = jnp.linalg.norm(query, axis=-1, keepdims=True)
    tn = jnp.linalg.norm(targets, axis=-1, keepdims=True)
    cos = (query @ targets.T) / jnp.maximum(qn * tn.T, 1e-8)
    logits = cos / temp
    logits = logits - jnp.max(logits, axis=1, keepdims=True)
    n = query.shape[0]
    qlen = queue.shape[0]
    inv_diag = ~jnp.eye(n, dtype=bool)
    inv_diag = jnp.concatenate([inv_diag, jnp.ones((n, qlen), dtype=bool)], axis=1)
    pos = (query_labels[:, None] == target_labels[None, :]) & inv_diag
    exp_logits = jnp.exp(logits) * inv_diag
    log_prob = logits - jnp.log(jnp.sum(exp_logits, axis=1, keepdims=True))
    cnt = jnp.sum(pos, axis=1)
    loss = -jnp.sum(log_prob * pos, axis=1) / cnt
    return jnp.mean(loss)


if __name__ == "__main__":
    # Small deterministic shapes; Q spans two 128-tiles so the padding / valid
    # masking and multi-tile online reduction are exercised.
    N, Q, D = 8, 200, 32
    NUM_CLASSES = 4

    key = jax.random.PRNGKey(0)
    k1, k2, k3 = jax.random.split(key, 3)
    query = jax.random.normal(k1, (N, D), dtype=jnp.float32)
    keys = jax.random.normal(k2, (N, D), dtype=jnp.float32)
    queue = jax.random.normal(k3, (Q, D), dtype=jnp.float32)
    # Every class appears in the queue, so every row has positives (cnt > 0).
    query_labels = jnp.arange(N, dtype=jnp.int32) % NUM_CLASSES
    queue_labels = jnp.arange(Q, dtype=jnp.int32) % NUM_CLASSES

    ref = supcon_with_queue_ref(query, keys, queue, query_labels, queue_labels)

    # f32 MXU, single "core", multi-step online reduction.
    l1 = supcon_with_queue(query, keys, queue, query_labels, queue_labels,
                           t_tile=128, mxu_dtype=jnp.float32, num_cores=1)
    l1 = jax.block_until_ready(l1)
    assert jnp.allclose(l1, ref, atol=1e-4, rtol=1e-4), (l1, ref)

    # f32 MXU, 2-way queue split (v7x megacore path; sequential on 1-TC chips).
    l2 = supcon_with_queue(query, keys, queue, query_labels, queue_labels,
                           t_tile=128, mxu_dtype=jnp.float32, num_cores=2)
    l2 = jax.block_until_ready(l2)
    assert jnp.allclose(l2, ref, atol=1e-4, rtol=1e-4), (l2, ref)

    # Default production path: bf16-streamed queue + bf16 MXU (f32 accumulation),
    # auto tile size; loose check against the f32 reference.
    l3 = supcon_with_queue(query, keys, queue, query_labels, queue_labels)
    l3 = jax.block_until_ready(l3)
    assert jnp.isfinite(l3) and jnp.abs(l3 - ref) < 0.5, (l3, ref)

    print("KERNEL_OK")
</pallas_src>

<mosaic_0001>
module attributes {stable_mosaic.version = 11 : i64} {
  func.func @_supcon_kernel(%arg0: i32, %arg1: i32, %arg2: memref<8x32xf32, #tpu.memory_space<vmem>>, %arg3: memref<32x8xf32, #tpu.memory_space<vmem>>, %arg4: memref<8x1xi32, #tpu.memory_space<vmem>>, %arg5: memref<1x8xi32, #tpu.memory_space<vmem>>, %arg6: memref<32x128xf32, #tpu.memory_space<vmem>>, %arg7: memref<1x128xi32, #tpu.memory_space<vmem>>, %arg8: memref<1x8x1xf32, #tpu.memory_space<vmem>>, %arg9: memref<1x8x1xf32, #tpu.memory_space<vmem>>, %arg10: memref<1x8x1xf32, #tpu.memory_space<vmem>>, %arg11: memref<8x32xf32, #tpu.memory_space<vmem>>, %arg12: memref<8x1xf32, #tpu.memory_space<vmem>>, %arg13: memref<8x1xf32, #tpu.memory_space<vmem>>, %arg14: memref<8x1xf32, #tpu.memory_space<vmem>>) attributes {dimension_semantics = [#tpu.dimension_semantics<parallel>, #tpu.dimension_semantics<arbitrary>], iteration_bounds = array<i64: 1, 2>, scalar_prefetch = 0 : i64, scratch_operands = 4 : i64, tpu.core_type = #tpu.core_type<tc>, window_params = [{pipeline_mode = #tpu.pipeline_mode<synchronous>, transform_indices = @transform_0, window_bounds = array<i64: 8, 32>}, {pipeline_mode = #tpu.pipeline_mode<synchronous>, transform_indices = @transform_1, window_bounds = array<i64: 32, 8>}, {pipeline_mode = #tpu.pipeline_mode<synchronous>, transform_indices = @transform_2, window_bounds = array<i64: 8, 1>}, {pipeline_mode = #tpu.pipeline_mode<synchronous>, transform_indices = @transform_3, window_bounds = array<i64: 1, 8>}, {transform_indices = @transform_4, window_bounds = array<i64: 32, 128>}, {transform_indices = @transform_5, window_bounds = array<i64: 1, 128>}, {transform_indices = @transform_6, window_bounds = array<i64: 1, 8, 1>}, {transform_indices = @transform_7, window_bounds = array<i64: 1, 8, 1>}, {transform_indices = @transform_8, window_bounds = array<i64: 1, 8, 1>}]} {
    %c0_i32 = arith.constant 0 : i32
    %0 = arith.cmpi eq, %arg1, %c0_i32 : i32
    %1 = arith.extui %0 : i1 to i32
    %c0_i32_0 = arith.constant 0 : i32
    %2 = arith.cmpi ne, %1, %c0_i32_0 : i32
    scf.if %2 {
      %c0_28 = arith.constant 0 : index
      %c0_29 = arith.constant 0 : index
      %59 = vector.load %arg2[%c0_28, %c0_29] : memref<8x32xf32, #tpu.memory_space<vmem>>, vector<8x32xf32>
      %60 = arith.mulf %59, %59 : vector<8x32xf32>
      %cst_30 = arith.constant dense<0.000000e+00> : vector<8xf32>
      %61 = vector.multi_reduction <add>, %60, %cst_30 [1] : vector<8x32xf32> to vector<8xf32>
      %62 = vector.shape_cast %61 : vector<8xf32> to vector<8x1xf32>
      %cst_31 = arith.constant 9.99999993E-9 : f32
      %63 = vector.broadcast %cst_31 : f32 to vector<8x1xf32>
      %64 = arith.maximumf %62, %63 : vector<8x1xf32>
      %65 = math.rsqrt %64 : vector<8x1xf32>
      %cst_32 = arith.constant 2.000000e+01 : f32
      %66 = vector.broadcast %cst_32 : f32 to vector<8x1xf32>
      %67 = arith.mulf %65, %66 : vector<8x1xf32>
      %68 = vector.broadcast %67 : vector<8x1xf32> to vector<8x32xf32>
      %69 = arith.mulf %59, %68 : vector<8x32xf32>
      %c0_33 = arith.constant 0 : index
      %c0_34 = arith.constant 0 : index
      %70 = vector.load %arg11[%c0_33, %c0_34] : memref<8x32xf32, #tpu.memory_space<vmem>>, vector<8x32xf32>
      tpu.vector_store %arg11[%c0_33, %c0_34], %69 {strides = array<i32>} : memref<8x32xf32, #tpu.memory_space<vmem>>, vector<8x32xf32>,
      %cst_35 = arith.constant -1.000000e+30 : f32
      %71 = vector.broadcast %cst_35 : f32 to vector<8x1xf32>
      %c0_36 = arith.constant 0 : index
      %c0_37 = arith.constant 0 : index
      %72 = vector.load %arg12[%c0_36, %c0_37] : memref<8x1xf32, #tpu.memory_space<vmem>>, vector<8x1xf32>
      tpu.vector_store %arg12[%c0_36, %c0_37], %71 {strides = array<i32>} : memref<8x1xf32, #tpu.memory_space<vmem>>, vector<8x1xf32>,
      %cst_38 = arith.constant 0.000000e+00 : f32
      %73 = vector.broadcast %cst_38 : f32 to vector<8x1xf32>
      %c0_39 = arith.constant 0 : index
      %c0_40 = arith.constant 0 : index
      %74 = vector.load %arg13[%c0_39, %c0_40] : memref<8x1xf32, #tpu.memory_space<vmem>>, vector<8x1xf32>
      tpu.vector_store %arg13[%c0_39, %c0_40], %73 {strides = array<i32>} : memref<8x1xf32, #tpu.memory_space<vmem>>, vector<8x1xf32>,
      %cst_41 = arith.constant 0.000000e+00 : f32
      %75 = vector.broadcast %cst_41 : f32 to vector<8x1xf32>
      %c0_42 = arith.constant 0 : index
      %c0_43 = arith.constant 0 : index
      %76 = vector.load %arg14[%c0_42, %c0_43] : memref<8x1xf32, #tpu.memory_space<vmem>>, vector<8x1xf32>
      tpu.vector_store %arg14[%c0_42, %c0_43], %75 {strides = array<i32>} : memref<8x1xf32, #tpu.memory_space<vmem>>, vector<8x1xf32>,
      %c0_i32_44 = arith.constant 0 : i32
      %77 = arith.cmpi eq, %arg0, %c0_i32_44 : i32
      %78 = arith.extui %77 : i1 to i32
      %c0_i32_45 = arith.constant 0 : i32
      %79 = arith.cmpi ne, %78, %c0_i32_45 : i32
      scf.if %79 {
        %c0_46 = arith.constant 0 : index
        %c0_47 = arith.constant 0 : index
        %80 = vector.load %arg3[%c0_46, %c0_47] : memref<32x8xf32, #tpu.memory_space<vmem>>, vector<32x8xf32>
        %81 = arith.mulf %80, %80 : vector<32x8xf32>
        %cst_48 = arith.constant dense<0.000000e+00> : vector<8xf32>
        %82 = vector.multi_reduction <add>, %81, %cst_48 [0] : vector<32x8xf32> to vector<8xf32>
        %83 = vector.shape_cast %82 : vector<8xf32> to vector<1x8xf32>
        %cst_49 = arith.constant 9.99999993E-9 : f32
        %84 = vector.broadcast %cst_49 : f32 to vector<1x8xf32>
        %85 = arith.maximumf %83, %84 : vector<1x8xf32>
        %86 = math.rsqrt %85 : vector<1x8xf32>
        %cst_50 = arith.constant dense<0.000000e+00> : vector<8x8xf32>
        %87 = tpu.matmul %69, %80, %cst_50 {dimension_numbers = #tpu.dot_dimension_numbers<[1], [0], [0], [1], [0, 0, 1, 1], [], []>} : vector<8x32xf32>, vector<32x8xf32>, vector<8x8xf32> -> vector<8x8xf32>
        %88 = vector.broadcast %86 : vector<1x8xf32> to vector<8x8xf32>
        %89 = arith.mulf %87, %88 : vector<8x8xf32>
        %90 = tpu.iota {dimensions = array<i32: 0>} : vector<8x8xi32>
        %91 = tpu.iota {dimensions = array<i32: 1>} : vector<8x8xi32>
        %92 = arith.cmpi ne, %90, %91 : vector<8x8xi32>
        %cst_51 = arith.constant -1.000000e+30 : f32
        %93 = vector.broadcast %cst_51 : f32 to vector<8x8xf32>
        %94 = arith.select %92, %89, %93 : vector<8x8xi1>, vector<8x8xf32>
        %cst_52 = arith.constant dense<0xFF800000> : vector<8xf32>
        %95 = vector.multi_reduction <maximumf>, %94, %cst_52 [1] : vector<8x8xf32> to vector<8xf32>
        %96 = vector.shape_cast %95 : vector<8xf32> to vector<8x1xf32>
        %c0_53 = arith.constant 0 : index
        %c0_54 = arith.constant 0 : index
        %97 = vector.load %arg12[%c0_53, %c0_54] : memref<8x1xf32, #tpu.memory_space<vmem>>, vector<8x1xf32>
        tpu.vector_store %arg12[%c0_53, %c0_54], %96 {strides = array<i32>} : memref<8x1xf32, #tpu.memory_space<vmem>>, vector<8x1xf32>,
        %98 = vector.broadcast %96 : vector<8x1xf32> to vector<8x8xf32>
        %99 = arith.subf %94, %98 : vector<8x8xf32>
        %100 = math.exp %99 : vector<8x8xf32>
        %cst_55 = arith.constant dense<0.000000e+00> : vector<8xf32>
        %101 = vector.multi_reduction <add>, %100, %cst_55 [1] : vector<8x8xf32> to vector<8xf32>
        %102 = vector.shape_cast %101 : vector<8xf32> to vector<8x1xf32>
        %c0_56 = arith.constant 0 : index
        %c0_57 = arith.constant 0 : index
        %103 = vector.load %arg13[%c0_56, %c0_57] : memref<8x1xf32, #tpu.memory_space<vmem>>, vector<8x1xf32>
        tpu.vector_store %arg13[%c0_56, %c0_57], %102 {strides = array<i32>} : memref<8x1xf32, #tpu.memory_space<vmem>>, vector<8x1xf32>,
        %c0_58 = arith.constant 0 : index
        %c0_59 = arith.constant 0 : index
        %104 = vector.load %arg4[%c0_58, %c0_59] : memref<8x1xi32, #tpu.memory_space<vmem>>, vector<8x1xi32>
        %c0_60 = arith.constant 0 : index
        %c0_61 = arith.constant 0 : index
        %105 = vector.load %arg5[%c0_60, %c0_61] : memref<1x8xi32, #tpu.memory_space<vmem>>, vector<1x8xi32>
        %106 = vector.broadcast %104 : vector<8x1xi32> to vector<8x8xi32>
        %107 = vector.broadcast %105 : vector<1x8xi32> to vector<8x8xi32>
        %108 = arith.cmpi eq, %106, %107 : vector<8x8xi32>
        %109 = arith.andi %108, %92 : vector<8x8xi1>
        %cst_62 = arith.constant 0.000000e+00 : f32
        %110 = vector.broadcast %cst_62 : f32 to vector<8x8xf32>
        %111 = arith.select %109, %89, %110 : vector<8x8xi1>, vector<8x8xf32>
        %cst_63 = arith.constant dense<0.000000e+00> : vector<8xf32>
        %112 = vector.multi_reduction <add>, %111, %cst_63 [1] : vector<8x8xf32> to vector<8xf32>
        %113 = vector.shape_cast %112 : vector<8xf32> to vector<8x1xf32>
        %c0_64 = arith.constant 0 : index
        %c0_65 = arith.constant 0 : index
        %114 = vector.load %arg14[%c0_64, %c0_65] : memref<8x1xf32, #tpu.memory_space<vmem>>, vector<8x1xf32>
        tpu.vector_store %arg14[%c0_64, %c0_65], %113 {strides = array<i32>} : memref<8x1xf32, #tpu.memory_space<vmem>>, vector<8x1xf32>,
      } else {
      }
    } else {
    }
    %c0 = arith.constant 0 : index
    %c0_1 = arith.constant 0 : index
    %3 = vector.load %arg6[%c0, %c0_1] : memref<32x128xf32, #tpu.memory_space<vmem>>, vector<32x128xf32>
    %4 = arith.mulf %3, %3 : vector<32x128xf32>
    %cst = arith.constant dense<0.000000e+00> : vector<128xf32>
    %5 = vector.multi_reduction <add>, %4, %cst [0] : vector<32x128xf32> to vector<128xf32>
    %6 = vector.shape_cast %5 : vector<128xf32> to vector<1x128xf32>
    %cst_2 = arith.constant 9.99999993E-9 : f32
    %7 = vector.broadcast %cst_2 : f32 to vector<1x128xf32>
    %8 = arith.maximumf %6, %7 : vector<1x128xf32>
    %9 = math.rsqrt %8 : vector<1x128xf32>
    %c0_3 = arith.constant 0 : index
    %c0_4 = arith.constant 0 : index
    %10 = vector.load %arg11[%c0_3, %c0_4] : memref<8x32xf32, #tpu.memory_space<vmem>>, vector<8x32xf32>
    %cst_5 = arith.constant dense<0.000000e+00> : vector<8x128xf32>
    %11 = tpu.matmul %10, %3, %cst_5 {dimension_numbers = #tpu.dot_dimension_numbers<[1], [0], [0], [1], [0, 0, 1, 1], [], []>} : vector<8x32xf32>, vector<32x128xf32>, vector<8x128xf32> -> vector<8x128xf32>
    %12 = vector.broadcast %9 : vector<1x128xf32> to vector<8x128xf32>
    %13 = arith.mulf %11, %12 : vector<8x128xf32>
    %14 = tpu.iota {dimensions = array<i32: 1>} : vector<1x128xi32>
    %c2_i32 = arith.constant 2 : i32
    %15 = arith.muli %arg0, %c2_i32 : i32
    %16 = arith.addi %15, %arg1 : i32
    %c128_i32 = arith.constant 128 : i32
    %17 = arith.muli %16, %c128_i32 : i32
    %18 = vector.broadcast %17 : i32 to vector<1x128xi32>
    %19 = arith.addi %14, %18 : vector<1x128xi32>
    %c200_i32 = arith.constant 200 : i32
    %20 = vector.broadcast %c200_i32 : i32 to vector<1x128xi32>
    %21 = arith.cmpi slt, %19, %20 : vector<1x128xi32>
    %cst_6 = arith.constant -1.000000e+30 : f32
    %22 = vector.shape_cast %21 : vector<1x128xi1> to vector<1x128xi1>
    %23 = vector.broadcast %22 : vector<1x128xi1> to vector<8x128xi1>
    %24 = vector.broadcast %cst_6 : f32 to vector<8x128xf32>
    %25 = arith.select %23, %13, %24 : vector<8x128xi1>, vector<8x128xf32>
    %c0_7 = arith.constant 0 : index
    %c0_8 = arith.constant 0 : index
    %26 = vector.load %arg12[%c0_7, %c0_8] : memref<8x1xf32, #tpu.memory_space<vmem>>, vector<8x1xf32>
    %cst_9 = arith.constant dense<0xFF800000> : vector<8xf32>
    %27 = vector.multi_reduction <maximumf>, %25, %cst_9 [1] : vector<8x128xf32> to vector<8xf32>
    %28 = vector.shape_cast %27 : vector<8xf32> to vector<8x1xf32>
    %29 = arith.maximumf %26, %28 : vector<8x1xf32>
    %30 = arith.subf %26, %29 : vector<8x1xf32>
    %31 = math.exp %30 : vector<8x1xf32>
    %c0_10 = arith.constant 0 : index
    %c0_11 = arith.constant 0 : index
    %32 = vector.load %arg13[%c0_10, %c0_11] : memref<8x1xf32, #tpu.memory_space<vmem>>, vector<8x1xf32>
    %33 = arith.mulf %31, %32 : vector<8x1xf32>
    %34 = vector.broadcast %29 : vector<8x1xf32> to vector<8x128xf32>
    %35 = arith.subf %25, %34 : vector<8x128xf32>
    %36 = math.exp %35 : vector<8x128xf32>
    %cst_12 = arith.constant dense<0.000000e+00> : vector<8xf32>
    %37 = vector.multi_reduction <add>, %36, %cst_12 [1] : vector<8x128xf32> to vector<8xf32>
    %38 = vector.shape_cast %37 : vector<8xf32> to vector<8x1xf32>
    %39 = arith.addf %33, %38 : vector<8x1xf32>
    %c0_13 = arith.constant 0 : index
    %c0_14 = arith.constant 0 : index
    %40 = vector.load %arg13[%c0_13, %c0_14] : memref<8x1xf32, #tpu.memory_space<vmem>>, vector<8x1xf32>
    tpu.vector_store %arg13[%c0_13, %c0_14], %39 {strides = array<i32>} : memref<8x1xf32, #tpu.memory_space<vmem>>, vector<8x1xf32>,
    %c0_15 = arith.constant 0 : index
    %c0_16 = arith.constant 0 : index
    %41 = vector.load %arg12[%c0_15, %c0_16] : memref<8x1xf32, #tpu.memory_space<vmem>>, vector<8x1xf32>
    tpu.vector_store %arg12[%c0_15, %c0_16], %29 {strides = array<i32>} : memref<8x1xf32, #tpu.memory_space<vmem>>, vector<8x1xf32>,
    %c0_17 = arith.constant 0 : index
    %c0_18 = arith.constant 0 : index
    %42 = vector.load %arg4[%c0_17, %c0_18] : memref<8x1xi32, #tpu.memory_space<vmem>>, vector<8x1xi32>
    %c0_19 = arith.constant 0 : index
    %c0_20 = arith.constant 0 : index
    %43 = vector.load %arg7[%c0_19, %c0_20] : memref<1x128xi32, #tpu.memory_space<vmem>>, vector<1x128xi32>
    %44 = vector.broadcast %42 : vector<8x1xi32> to vector<8x128xi32>
    %45 = vector.broadcast %43 : vector<1x128xi32> to vector<8x128xi32>
    %46 = arith.cmpi eq, %44, %45 : vector<8x128xi32>
    %47 = vector.broadcast %21 : vector<1x128xi1> to vector<8x128xi1>
    %48 = arith.andi %46, %47 : vector<8x128xi1>
    %c0_21 = arith.constant 0 : index
    %c0_22 = arith.constant 0 : index
    %49 = vector.load %arg14[%c0_21, %c0_22] : memref<8x1xf32, #tpu.memory_space<vmem>>, vector<8x1xf32>
    %cst_23 = arith.constant 0.000000e+00 : f32
    %50 = vector.broadcast %cst_23 : f32 to vector<8x128xf32>
    %51 = arith.select %48, %13, %50 : vector<8x128xi1>, vector<8x128xf32>
    %cst_24 = arith.constant dense<0.000000e+00> : vector<8xf32>
    %52 = vector.multi_reduction <add>, %51, %cst_24 [1] : vector<8x128xf32> to vector<8xf32>
    %53 = vector.shape_cast %52 : vector<8xf32> to vector<8x1xf32>
    %54 = arith.addf %49, %53 : vector<8x1xf32>
    %c0_25 = arith.constant 0 : index
    %c0_26 = arith.constant 0 : index
    %55 = vector.load %arg14[%c0_25, %c0_26] : memref<8x1xf32, #tpu.memory_space<vmem>>, vector<8x1xf32>
    tpu.vector_store %arg14[%c0_25, %c0_26], %54 {strides = array<i32>} : memref<8x1xf32, #tpu.memory_space<vmem>>, vector<8x1xf32>,
    %c1_i32 = arith.constant 1 : i32
    %56 = arith.cmpi eq, %arg1, %c1_i32 : i32
    %57 = arith.extui %56 : i1 to i32
    %c0_i32_27 = arith.constant 0 : i32
    %58 = arith.cmpi ne, %57, %c0_i32_27 : i32
    scf.if %58 {
      %c0_28 = arith.constant 0 : index
      %c0_29 = arith.constant 0 : index
      %59 = vector.load %arg12[%c0_28, %c0_29] : memref<8x1xf32, #tpu.memory_space<vmem>>, vector<8x1xf32>
      %c0_30 = arith.constant 0 : index
      %c0_31 = arith.constant 0 : index
      %c0_32 = arith.constant 0 : index
      %60 = vector.load %arg8[%c0_30, %c0_31, %c0_32] : memref<1x8x1xf32, #tpu.memory_space<vmem>>, vector<1x8x1xf32>
      %61 = vector.shape_cast %60 : vector<1x8x1xf32> to vector<8x1xf32>
      %62 = vector.shape_cast %59 : vector<8x1xf32> to vector<1x8x1xf32>
      tpu.vector_store %arg8[%c0_30, %c0_31, %c0_32], %62 {strides = array<i32>} : memref<1x8x1xf32, #tpu.memory_space<vmem>>, vector<1x8x1xf32>,
      %c0_33 = arith.constant 0 : index
      %c0_34 = arith.constant 0 : index
      %63 = vector.load %arg13[%c0_33, %c0_34] : memref<8x1xf32, #tpu.memory_space<vmem>>, vector<8x1xf32>
      %c0_35 = arith.constant 0 : index
      %c0_36 = arith.constant 0 : index
      %c0_37 = arith.constant 0 : index
      %64 = vector.load %arg9[%c0_35, %c0_36, %c0_37] : memref<1x8x1xf32, #tpu.memory_space<vmem>>, vector<1x8x1xf32>
      %65 = vector.shape_cast %64 : vector<1x8x1xf32> to vector<8x1xf32>
      %66 = vector.shape_cast %63 : vector<8x1xf32> to vector<1x8x1xf32>
      tpu.vector_store %arg9[%c0_35, %c0_36, %c0_37], %66 {strides = array<i32>} : memref<1x8x1xf32, #tpu.memory_space<vmem>>, vector<1x8x1xf32>,
      %c0_38 = arith.constant 0 : index
      %c0_39 = arith.constant 0 : index
      %67 = vector.load %arg14[%c0_38, %c0_39] : memref<8x1xf32, #tpu.memory_space<vmem>>, vector<8x1xf32>
      %c0_40 = arith.constant 0 : index
      %c0_41 = arith.constant 0 : index
      %c0_42 = arith.constant 0 : index
      %68 = vector.load %arg10[%c0_40, %c0_41, %c0_42] : memref<1x8x1xf32, #tpu.memory_space<vmem>>, vector<1x8x1xf32>
      %69 = vector.shape_cast %68 : vector<1x8x1xf32> to vector<8x1xf32>
      %70 = vector.shape_cast %67 : vector<8x1xf32> to vector<1x8x1xf32>
      tpu.vector_store %arg10[%c0_40, %c0_41, %c0_42], %70 {strides = array<i32>} : memref<1x8x1xf32, #tpu.memory_space<vmem>>, vector<1x8x1xf32>,
    } else {
    }
    return
  }
  func.func @transform_0(%arg0: i32, %arg1: i32) -> (i32, i32) {
    %c0_i32 = arith.constant 0 : i32
    %c0_i32_0 = arith.constant 0 : i32
    %c0_i32_1 = arith.constant 0 : i32
    return %c0_i32, %c0_i32_0 : i32, i32
  }
  func.func @transform_1(%arg0: i32, %arg1: i32) -> (i32, i32) {
    %c0_i32 = arith.constant 0 : i32
    %c0_i32_0 = arith.constant 0 : i32
    %c0_i32_1 = arith.constant 0 : i32
    return %c0_i32, %c0_i32_0 : i32, i32
  }
  func.func @transform_2(%arg0: i32, %arg1: i32) -> (i32, i32) {
    %c0_i32 = arith.constant 0 : i32
    %c0_i32_0 = arith.constant 0 : i32
    %c0_i32_1 = arith.constant 0 : i32
    return %c0_i32, %c0_i32_0 : i32, i32
  }
  func.func @transform_3(%arg0: i32, %arg1: i32) -> (i32, i32) {
    %c0_i32 = arith.constant 0 : i32
    %c0_i32_0 = arith.constant 0 : i32
    %c0_i32_1 = arith.constant 0 : i32
    return %c0_i32, %c0_i32_0 : i32, i32
  }
  func.func @transform_4(%arg0: i32, %arg1: i32) -> (i32, i32) {
    %c2_i32 = arith.constant 2 : i32
    %0 = arith.muli %arg0, %c2_i32 : i32
    %1 = arith.addi %0, %arg1 : i32
    %c0_i32 = arith.constant 0 : i32
    %c0_i32_0 = arith.constant 0 : i32
    return %c0_i32, %1 : i32, i32
  }
  func.func @transform_5(%arg0: i32, %arg1: i32) -> (i32, i32) {
    %c2_i32 = arith.constant 2 : i32
    %0 = arith.muli %arg0, %c2_i32 : i32
    %1 = arith.addi %0, %arg1 : i32
    %c0_i32 = arith.constant 0 : i32
    %c0_i32_0 = arith.constant 0 : i32
    return %c0_i32, %1 : i32, i32
  }
  func.func @transform_6(%arg0: i32, %arg1: i32) -> (i32, i32, i32) {
    %c0_i32 = arith.constant 0 : i32
    %c0_i32_0 = arith.constant 0 : i32
    %c0_i32_1 = arith.constant 0 : i32
    return %arg0, %c0_i32, %c0_i32_0 : i32, i32, i32
  }
  func.func @transform_7(%arg0: i32, %arg1: i32) -> (i32, i32, i32) {
    %c0_i32 = arith.constant 0 : i32
    %c0_i32_0 = arith.constant 0 : i32
    %c0_i32_1 = arith.constant 0 : i32
    return %arg0, %c0_i32, %c0_i32_0 : i32, i32, i32
  }
  func.func @transform_8(%arg0: i32, %arg1: i32) -> (i32, i32, i32) {
    %c0_i32 = arith.constant 0 : i32
    %c0_i32_0 = arith.constant 0 : i32
    %c0_i32_1 = arith.constant 0 : i32
    return %arg0, %c0_i32, %c0_i32_0 : i32, i32, i32
  }
}

</mosaic_0001>

<llo_original>
// kernel: tpu_custom_call.1
$region0: #{tpu_custom_call.1}
  #allocation0 [shape = 'u32[]', space=smem, size = 0x4, offset = 0x4, fixed_abs, tag = 'smem constant byte address 0x4 - core index']
  #allocation1 [shape = 'u32[72,128]{1,0:T(1,128)}', space=vmem, size = 0x9000, scoped, tag = 'internal scratch']
  #allocation2 [shape = 'f32[8,32]{1,0:T(8,128)}', space=vmem, size = 0x1000, scoped, tag = 'scratch operand']
  #allocation3 [shape = 'f32[8,1]{1,0:T(8,128)}', space=vmem, size = 0x1000, scoped, tag = 'scratch operand']
  #allocation4 [shape = 'f32[8,1]{1,0:T(8,128)}', space=vmem, size = 0x1000, scoped, tag = 'scratch operand']
  #allocation5 [shape = 'f32[8,1]{1,0:T(8,128)}', space=vmem, size = 0x1000, scoped, tag = 'scratch operand']
  %s0 = inlined_call_operand.vmem [shape: f32[8,32], index: 0, kind: input, shape index: {}]
  %s1 = inlined_call_operand.vmem [shape: f32[32,8], index: 1, kind: input, shape index: {}]
  %s2 = inlined_call_operand.vmem [shape: s32[8,1], index: 2, kind: input, shape index: {}]
  %s3 = inlined_call_operand.vmem [shape: s32[1,8], index: 3, kind: input, shape index: {}]
  %s4 = inlined_call_operand.hbm [shape: f32[32,256], index: 4, kind: input, shape index: {}]
  %s5 = inlined_call_operand.vmem [shape: s32[1,256], index: 5, kind: input, shape index: {}]
  %s6 = inlined_call_operand.vmem [shape: f32[1,8,1], index: 6, kind: output, shape index: {0}]
  %s7 = inlined_call_operand.vmem [shape: f32[1,8,1], index: 7, kind: output, shape index: {1}]
  %s8 = inlined_call_operand.vmem [shape: f32[1,8,1], index: 8, kind: output, shape index: {2}]
  %9 = xla_tuple %s6, %s7, %s8
  %s10 = sld [smem:[#allocation0]]
  $region89: #{tpu_custom_call.1} parent=0
    _
  %s12 = ssub.s32 1, %s10
  %s13 = scalar_select 0, %s12, %s10
  $region1: #{tpu_custom_call.1} parent=0
    #allocation6 [shape = 'u8[32768]{0}', space=vmem, size = 0x8000, scoped, tag = 'input window, operand 4']
    #allocation7 [shape = 's32[2]{0}', space=sflag, size = 0x8, scoped, tag = 'scoped memory for tpu_custom_call.1']
    %14 = vsyncpa [#allocation7], 0
    %s15 = scalar_lea.sflag [#allocation7], 1
    %16 = vsyncpa %s15, 0
    loop: start=0, step=1, limit=4
    $region2: #{tpu_custom_call.1} parent=1 // loop_pre_header
      _
    $region3: #{tpu_custom_call.1} parent=1 // loop_header
      %s18 = sphi 0, %s22
      %p19 = scmp.ge.s32.totalorder %s18, 4
      %s25 = sphi 0, %s37
      %s26 = sphi 0, %s33
      %s27 = sphi 0, %s25
      %s28 = sphi 0, %s26
      %s29 = sphi 0, %s27
      %s30 = sphi 0, %s28
      %s38 = sphi 0, %s38
      %s40 = sphi 0, %s38
      %s41 = sphi 0, %s40
      %s55 = sphi 0, %s41
      %s59 = sphi 0, %s59
      %s61 = sphi 0, %s59
      %s62 = sphi 0, %s61
      %s76 = sphi 0, %s62
      %s80 = sphi 0, %s80
      %s82 = sphi 0, %s80
      %s83 = sphi 0, %s82
      %s97 = sphi 0, %s83
      %s101 = sphi 0, %s101
      %s103 = sphi 0, %s101
      %s104 = sphi 0, %s103
      %s118 = sphi 0, %s104
      %s128 = sphi 0, %s130
      %s131 = sphi 0, %s128
      %s132 = sphi 0, %s131
      %s148 = sphi 0, %s132
      %s158 = sphi 0, %s160
      %s161 = sphi 0, %s158
      %s162 = sphi 0, %s161
      %s178 = sphi 0, %s162
      %s184 = sphi 0, %s186
      %s187 = sphi 0, %s184
      %s188 = sphi 0, %s187
      %s204 = sphi 0, %s188
      %s210 = sphi 0, %s212
      %s213 = sphi 0, %s210
      %s214 = sphi 0, %s213
      %s230 = sphi 0, %s214
      %s236 = sphi 0, %s238
      %s239 = sphi 0, %s236
      %s240 = sphi 0, %s239
      %s256 = sphi 0, %s240
    $region4: #{tpu_custom_call.1} parent=1 // loop_header_branch
      %21 = sbr.rel (%p19) target = $region8
    $region5: #{tpu_custom_call.1} parent=1 // loop_body
      %s23 = ssub.s32 %s18, 1
      %s24 = ssub.s32 %s18, 2
      %s31 = sadd.s32 1, %s26
      %p32 = scmp.ge.s32.totalorder %s31, 2
      %s33 = scalar_select %p32, 0, %s31
      %s34 = sadd.s32 1, %s25
      %s35 = scalar_select %p32, %s34, %s25
      %p36 = scmp.ge.s32.totalorder %s35, 1
      %s37 = scalar_select %p36, 0, %s35
      %s39 = sadd.s32 %s38, 1
      %p42 = scmp.eq.s32.totalorder %s18, 1
      %p43 = scmp.ne.s32.totalorder %s38, %s40
      %p44 = scmp.eq.s32.totalorder %s18, 0
      %p45 = por %p43, %p44
      %p46 = scmp.ne.s32.totalorder %s38, %s40
      %p47 = scmp.eq.s32.totalorder %s23, 1
      %p48 = por %p46, %p47
      %p49 = scmp.ne.s32.totalorder %s40, %s41
      %p50 = scmp.eq.s32.totalorder %s23, 0
      %p51 = por %p49, %p50
      %p52 = scmp.ne.s32.totalorder %s40, %s41
      %p53 = scmp.eq.s32.totalorder %s24, 1
      %p54 = por %p52, %p53
      %p56 = scmp.ne.s32.totalorder %s41, %s55
      %p57 = scmp.eq.s32.totalorder %s24, 0
      %p58 = por %p56, %p57
      %s60 = sadd.s32 %s59, 1
      %p63 = scmp.eq.s32.totalorder %s18, 1
      %p64 = scmp.ne.s32.totalorder %s59, %s61
      %p65 = scmp.eq.s32.totalorder %s18, 0
      %p66 = por %p64, %p65
      %p67 = scmp.ne.s32.totalorder %s59, %s61
      %p68 = scmp.eq.s32.totalorder %s23, 1
      %p69 = por %p67, %p68
      %p70 = scmp.ne.s32.totalorder %s61, %s62
      %p71 = scmp.eq.s32.totalorder %s23, 0
      %p72 = por %p70, %p71
      %p73 = scmp.ne.s32.totalorder %s61, %s62
      %p74 = scmp.eq.s32.totalorder %s24, 1
      %p75 = por %p73, %p74
      %p77 = scmp.ne.s32.totalorder %s62, %s76
      %p78 = scmp.eq.s32.totalorder %s24, 0
      %p79 = por %p77, %p78
      %s81 = sadd.s32 %s80, 1
      %p84 = scmp.eq.s32.totalorder %s18, 1
      %p85 = scmp.ne.s32.totalorder %s80, %s82
      %p86 = scmp.eq.s32.totalorder %s18, 0
      %p87 = por %p85, %p86
      %p88 = scmp.ne.s32.totalorder %s80, %s82
      %p89 = scmp.eq.s32.totalorder %s23, 1
      %p90 = por %p88, %p89
      %p91 = scmp.ne.s32.totalorder %s82, %s83
      %p92 = scmp.eq.s32.totalorder %s23, 0
      %p93 = por %p91, %p92
      %p94 = scmp.ne.s32.totalorder %s82, %s83
      %p95 = scmp.eq.s32.totalorder %s24, 1
      %p96 = por %p94, %p95
      %p98 = scmp.ne.s32.totalorder %s83, %s97
      %p99 = scmp.eq.s32.totalorder %s24, 0
      %p100 = por %p98, %p99
      %s102 = sadd.s32 %s101, 1
      %p105 = scmp.eq.s32.totalorder %s18, 1
      %p106 = scmp.ne.s32.totalorder %s101, %s103
      %p107 = scmp.eq.s32.totalorder %s18, 0
      %p108 = por %p106, %p107
      %p109 = scmp.ne.s32.totalorder %s101, %s103
      %p110 = scmp.eq.s32.totalorder %s23, 1
      %p111 = por %p109, %p110
      %p112 = scmp.ne.s32.totalorder %s103, %s104
      %p113 = scmp.eq.s32.totalorder %s23, 0
      %p114 = por %p112, %p113
      %p115 = scmp.ne.s32.totalorder %s103, %s104
      %p116 = scmp.eq.s32.totalorder %s24, 1
      %p117 = por %p115, %p116
      %p119 = scmp.ne.s32.totalorder %s104, %s118
      %p120 = scmp.eq.s32.totalorder %s24, 0
      %p121 = por %p119, %p120
      %s122 = smul.u32 %s25, 2
      %s123 = sadd.s32 %s122, %s26
      %s124 = smul.u32 %s37, 2
      %s125 = sadd.s32 %s124, %s33
      %s126 = ssub.s32 %s123, %s125
      %p127 = scmp.eq.s32.totalorder %s126, 0
      %s129 = sadd.s32 %s128, 1
      %s130 = scalar_select %p127, %s128, %s129
      %p133 = pneg %p127
      %p134 = scmp.eq.s32.totalorder %s18, 1
      %p135 = por %p133, %p134
      %p136 = scmp.ne.s32.totalorder %s128, %s131
      %p137 = scmp.eq.s32.totalorder %s18, 0
      %p138 = por %p136, %p137
      %p139 = scmp.ne.s32.totalorder %s128, %s131
      %p140 = scmp.eq.s32.totalorder %s23, 1
      %p141 = por %p139, %p140
      %p142 = scmp.ne.s32.totalorder %s131, %s132
      %p143 = scmp.eq.s32.totalorder %s23, 0
      %p144 = por %p142, %p143
      %p145 = scmp.ne.s32.totalorder %s131, %s132
      %p146 = scmp.eq.s32.totalorder %s24, 1
      %p147 = por %p145, %p146
      %p149 = scmp.ne.s32.totalorder %s132, %s148
      %p150 = scmp.eq.s32.totalorder %s24, 0
      %p151 = por %p149, %p150
      %s152 = smul.u32 %s25, 2
      %s153 = sadd.s32 %s152, %s26
      %s154 = smul.u32 %s37, 2
      %s155 = sadd.s32 %s154, %s33
      %s156 = ssub.s32 %s153, %s155
      %p157 = scmp.eq.s32.totalorder %s156, 0
      %s159 = sadd.s32 %s158, 1
      %s160 = scalar_select %p157, %s158, %s159
      %p163 = pneg %p157
      %p164 = scmp.eq.s32.totalorder %s18, 1
      %p165 = por %p163, %p164
      %p166 = scmp.ne.s32.totalorder %s158, %s161
      %p167 = scmp.eq.s32.totalorder %s18, 0
      %p168 = por %p166, %p167
      %p169 = scmp.ne.s32.totalorder %s158, %s161
      %p170 = scmp.eq.s32.totalorder %s23, 1
      %p171 = por %p169, %p170
      %p172 = scmp.ne.s32.totalorder %s161, %s162
      %p173 = scmp.eq.s32.totalorder %s23, 0
      %p174 = por %p172, %p173
      %p175 = scmp.ne.s32.totalorder %s161, %s162
      %p176 = scmp.eq.s32.totalorder %s24, 1
      %p177 = por %p175, %p176
      %p179 = scmp.ne.s32.totalorder %s162, %s178
      %p180 = scmp.eq.s32.totalorder %s24, 0
      %p181 = por %p179, %p180
      %s182 = ssub.s32 %s25, %s37
      %p183 = scmp.eq.s32.totalorder %s182, 0
      %s185 = sadd.s32 %s184, 1
      %s186 = scalar_select %p183, %s184, %s185
      %p189 = pneg %p183
      %p190 = scmp.eq.s32.totalorder %s18, 1
      %p191 = por %p189, %p190
      %p192 = scmp.ne.s32.totalorder %s184, %s187
      %p193 = scmp.eq.s32.totalorder %s18, 0
      %p194 = por %p192, %p193
      %p195 = scmp.ne.s32.totalorder %s184, %s187
      %p196 = scmp.eq.s32.totalorder %s23, 1
      %p197 = por %p195, %p196
      %p198 = scmp.ne.s32.totalorder %s187, %s188
      %p199 = scmp.eq.s32.totalorder %s23, 0
      %p200 = por %p198, %p199
      %p201 = scmp.ne.s32.totalorder %s187, %s188
      %p202 = scmp.eq.s32.totalorder %s24, 1
      %p203 = por %p201, %p202
      %p205 = scmp.ne.s32.totalorder %s188, %s204
      %p206 = scmp.eq.s32.totalorder %s24, 0
      %p207 = por %p205, %p206
      %s208 = ssub.s32 %s25, %s37
      %p209 = scmp.eq.s32.totalorder %s208, 0
      %s211 = sadd.s32 %s210, 1
      %s212 = scalar_select %p209, %s210, %s211
      %p215 = pneg %p209
      %p216 = scmp.eq.s32.totalorder %s18, 1
      %p217 = por %p215, %p216
      %p218 = scmp.ne.s32.totalorder %s210, %s213
      %p219 = scmp.eq.s32.totalorder %s18, 0
      %p220 = por %p218, %p219
      %p221 = scmp.ne.s32.totalorder %s210, %s213
      %p222 = scmp.eq.s32.totalorder %s23, 1
      %p223 = por %p221, %p222
      %p224 = scmp.ne.s32.totalorder %s213, %s214
      %p225 = scmp.eq.s32.totalorder %s23, 0
      %p226 = por %p224, %p225
      %p227 = scmp.ne.s32.totalorder %s213, %s214
      %p228 = scmp.eq.s32.totalorder %s24, 1
      %p229 = por %p227, %p228
      %p231 = scmp.ne.s32.totalorder %s214, %s230
      %p232 = scmp.eq.s32.totalorder %s24, 0
      %p233 = por %p231, %p232
      %s234 = ssub.s32 %s25, %s37
      %p235 = scmp.eq.s32.totalorder %s234, 0
      %s237 = sadd.s32 %s236, 1
      %s238 = scalar_select %p235, %s236, %s237
      %p241 = pneg %p235
      %p242 = scmp.eq.s32.totalorder %s18, 1
      %p243 = por %p241, %p242
      %p244 = scmp.ne.s32.totalorder %s236, %s239
      %p245 = scmp.eq.s32.totalorder %s18, 0
      %p246 = por %p244, %p245
      %p247 = scmp.ne.s32.totalorder %s236, %s239
      %p248 = scmp.eq.s32.totalorder %s23, 1
      %p249 = por %p247, %p248
      %p250 = scmp.ne.s32.totalorder %s239, %s240
      %p251 = scmp.eq.s32.totalorder %s23, 0
      %p252 = por %p250, %p251
      %p253 = scmp.ne.s32.totalorder %s239, %s240
      %p254 = scmp.eq.s32.totalorder %s24, 1
      %p255 = por %p253, %p254
      %p257 = scmp.ne.s32.totalorder %s240, %s256
      %p258 = scmp.eq.s32.totalorder %s24, 0
      %p259 = por %p257, %p258
      %p260 = scmp.le.s32.totalorder 1, %s18
      %p261 = scmp.lt.s32.totalorder %s18, 3
      %p262 = pnand %p260, %p261
      %p263 = pneg %p262
      // Predicated region
      $region9: #{tpu_custom_call.1} parent=5 // pred_check
        _
      $region10: #{tpu_custom_call.1} parent=5 // pred_check_branch
        %265 = sbr.rel (%p262) target = $region12
      $region11: #{tpu_custom_call.1} parent=5 // pred_region
        %s266 = ssub.s32 %s18, 1
        // Predicated region
        $region13: #{tpu_custom_call.1} parent=11 // pred_check
          %p267 = pneg %p51
        $region14: #{tpu_custom_call.1} parent=11 // pred_check_branch
          %269 = sbr.rel (%p267) target = $region16
        $region15: #{tpu_custom_call.1} parent=11 // pred_region
          _
        $region16: #{tpu_custom_call.1} parent=11 // pred_fallthru
          _
        // Predicated region
        $region17: #{tpu_custom_call.1} parent=11 // pred_check
          %p270 = pneg %p72
        $region18: #{tpu_custom_call.1} parent=11 // pred_check_branch
          %272 = sbr.rel (%p270) target = $region20
        $region19: #{tpu_custom_call.1} parent=11 // pred_region
          _
        $region20: #{tpu_custom_call.1} parent=11 // pred_fallthru
          _
        // Predicated region
        $region21: #{tpu_custom_call.1} parent=11 // pred_check
          %p273 = pneg %p93
        $region22: #{tpu_custom_call.1} parent=11 // pred_check_branch
          %275 = sbr.rel (%p273) target = $region24
        $region23: #{tpu_custom_call.1} parent=11 // pred_region
          _
        $region24: #{tpu_custom_call.1} parent=11 // pred_fallthru
          _
        // Predicated region
        $region25: #{tpu_custom_call.1} parent=11 // pred_check
          %p276 = pneg %p114
        $region26: #{tpu_custom_call.1} parent=11 // pred_check_branch
          %278 = sbr.rel (%p276) target = $region28
        $region27: #{tpu_custom_call.1} parent=11 // pred_region
          _
        $region28: #{tpu_custom_call.1} parent=11 // pred_fallthru
          _
      $region12: #{tpu_custom_call.1} parent=5 // pred_fallthru
        _
      %p279 = scmp.lt.s32.totalorder %s18, 2
      // Predicated region
      $region29: #{tpu_custom_call.1} parent=5 // pred_check
        %p280 = pneg %p279
      $region30: #{tpu_custom_call.1} parent=5 // pred_check_branch
        %282 = sbr.rel (%p280) target = $region32
      $region31: #{tpu_custom_call.1} parent=5 // pred_region
        // Predicated region
        $region33: #{tpu_custom_call.1} parent=31 // pred_check
          %p283 = pneg %p138
        $region34: #{tpu_custom_call.1} parent=31 // pred_check_branch
          %285 = sbr.rel (%p283) target = $region36
        $region35: #{tpu_custom_call.1} parent=31 // pred_region
          %s286 = sand.u32 %s128, 1
          %s287 = scalar_lea.sflag [#allocation7], %s286
          %s288 = sand.u32 %s128, 1
          %s289 = smul.addr %s288, 32
          %s290 = scalar_lea.vmem [#allocation6], %s289
          %s291 = smul.u32 %s25, 2
          %s292 = sadd.s32 %s291, %s26
          %294 = vsyncadd %s287, 0
          %s295 = smul.addr %s292, 8
          %s296 = scalar_lea.hbm %s4, %s295
          %s297 = sshll.u32 %s296, 4
          %s298 = int_to_ptr.hbm [resolvable:$true] %s297
          %s299 = sshll.u32 %s290, 4
          %s300 = int_to_ptr.vmem [resolvable:$true] %s299
          %305 = dma.hbm_to_vmem [thread:$0]  %s298, 512, %s300, %s287, 256, 128, 8
        $region36: #{tpu_custom_call.1} parent=31 // pred_fallthru
          _
        // Predicated region
        $region37: #{tpu_custom_call.1} parent=31 // pred_check
          %p306 = pneg %p168
        $region38: #{tpu_custom_call.1} parent=31 // pred_check_branch
          %308 = sbr.rel (%p306) target = $region40
        $region39: #{tpu_custom_call.1} parent=31 // pred_region
          %s309 = smul.u32 %s25, 2
          %s310 = sadd.s32 %s309, %s26
          %p311 = scmp.lt.s32.totalorder %s310, 1
          %s312 = scalar_select %p311, %s310, 1
          %s313 = scalar_lea.vmem %s5, %s312
          %s314 = smul.u32 %s25, 2
          %s315 = sadd.s32 %s314, %s26
        $region40: #{tpu_custom_call.1} parent=31 // pred_fallthru
          _
      $region32: #{tpu_custom_call.1} parent=5 // pred_fallthru
        _
      %p316 = scmp.le.s32.totalorder 1, %s18
      %p317 = scmp.lt.s32.totalorder %s18, 3
      %p318 = pnand %p316, %p317
      %p319 = pneg %p318
      // Predicated region
      $region41: #{tpu_custom_call.1} parent=5 // pred_check
        _
      $region42: #{tpu_custom_call.1} parent=5 // pred_check_branch
        %321 = sbr.rel (%p318) target = $region44
      $region43: #{tpu_custom_call.1} parent=5 // pred_region
        %s322 = ssub.s32 %s18, 1
        %s323 = sand.u32 %s131, 1
        %s324 = scalar_lea.sflag [#allocation7], %s323
        %s325 = sand.u32 %s131, 1
        %s326 = smul.addr %s325, 32
        %s327 = scalar_lea.vmem [#allocation6], %s326
        // Predicated region
        $region45: #{tpu_custom_call.1} parent=43 // pred_check
          %p328 = pneg %p144
        $region46: #{tpu_custom_call.1} parent=43 // pred_check_branch
          %330 = sbr.rel (%p328) target = $region48
        $region47: #{tpu_custom_call.1} parent=43 // pred_region
          %332 = dma.done %s324, 512
        $region48: #{tpu_custom_call.1} parent=43 // pred_fallthru
          _
        %p333 = pneg %p51
        %p334 = pneg %p48
        %p335 = pneg %p72
        %p336 = pneg %p69
        %p337 = pneg %p93
        %p338 = pneg %p90
        %p339 = pneg %p114
        %p340 = pneg %p111
        %s341 = sand.u32 %s131, 1
        %s342 = scalar_lea.sflag [#allocation7], %s341
        %s343 = sand.u32 %s131, 1
        %s344 = smul.addr %s343, 32
        %s345 = scalar_lea.vmem [#allocation6], %s344
        %p346 = pneg %p144
        %p347 = pneg %p141
        %s348 = smul.u32 %s27, 2
        %s349 = sadd.s32 %s348, %s28
        %p350 = scmp.lt.s32.totalorder %s349, 1
        %s351 = scalar_select %p350, %s349, 1
        %s352 = scalar_lea.vmem %s5, %s351
        %p353 = pneg %p174
        %p354 = pneg %p171
        %p355 = pneg %p200
        %p356 = pneg %p197
        %p357 = scmp.lt.s32.totalorder %s27, 0
        %s358 = scalar_select %p357, %s27, 0
        %s359 = smul.addr %s358, 8
        %s360 = scalar_lea.vmem %s6, %s359
        %p361 = pneg %p226
        %p362 = pneg %p223
        %p363 = scmp.lt.s32.totalorder %s27, 0
        %s364 = scalar_select %p363, %s27, 0
        %s365 = smul.addr %s364, 8
        %s366 = scalar_lea.vmem %s7, %s365
        %p367 = pneg %p252
        %p368 = pneg %p249
        %p369 = scmp.lt.s32.totalorder %s27, 0
        %s370 = scalar_select %p369, %s27, 0
        %s371 = smul.addr %s370, 8
        %s372 = scalar_lea.vmem %s8, %s371
        %s373 = smul.u32 %s27, 2
        %s374 = sadd.s32 %s373, %s28
        %s375 = smul.u32 %s27, 2
        %s376 = sadd.s32 %s375, %s28
        %p377 = scmp.lt.s32.totalorder %s376, 1
        %s378 = scalar_select %p377, %s376, 1
        %s379 = scalar_lea.vmem %s5, %s378
        %s380 = smul.u32 %s27, 2
        %s381 = sadd.s32 %s380, %s28
        %p382 = scmp.lt.s32.totalorder %s27, 0
        %s383 = scalar_select %p382, %s27, 0
        %s384 = smul.addr %s383, 8
        %s385 = scalar_lea.vmem %s6, %s384
        %p386 = scmp.lt.s32.totalorder %s27, 0
        %s387 = scalar_select %p386, %s27, 0
        %s388 = smul.addr %s387, 8
        %s389 = scalar_lea.vmem %s7, %s388
        %p390 = scmp.lt.s32.totalorder %s27, 0
        %s391 = scalar_select %p390, %s27, 0
        %s392 = smul.addr %s391, 8
        %s393 = scalar_lea.vmem %s8, %s392
        %p394 = scmp.eq.s32.totalorder %s28, 0
        // Predicated region
        $region49: #{tpu_custom_call.1} parent=43 // pred_check
          %p395 = pneg %p394
        $region50: #{tpu_custom_call.1} parent=43 // pred_check_branch
          %397 = sbr.rel (%p395) target = $region52
        $region51: #{tpu_custom_call.1} parent=43 // pred_region
          %v398 = vld [vmem:[%s0] sm:$0xff]
          %v399 = vmul.f32 %v398, %v398
          %vm400 = vcmask 261120
          %v401 = vsel %vm400, %v399, 0.0
          %402 = vadd.xlane.f32.xlu0 %v401
          %v403 = vpop.xlane.xlu0 %402
          %v404 = vmax.f32 %v403, 1e-08
          %v405 = vrsqrt.pop %v404
          %v406 = vmul.f32 %v405, %v404
          %v407 = vmul.f32 %v406, %v405
          %v408 = vmul.f32 0.5, %v407
          %v409 = vsub.f32 1.5, %v408
          %v410 = vmul.f32 %v405, %v409
          %vm411 = vweird.f32 %v404
          %vm412 = vweird.f32 %v405
          %vm413 = vmor %vm411, %vm412
          %v414 = vsel %vm413, %v405, %v410
          %v415 = vmul.f32 %v414, 20.0
          %v416 = vmul.f32 %v398, %v415
          %417 = vst.msk [vmem:[#allocation2] sm:$0xff] %vm400, %v416
          %vm418 = vcmask 7168
          %419 = vst.msk [vmem:[#allocation3] sm:$0xff] %vm418, -1e+30
          %420 = vst.msk [vmem:[#allocation4] sm:$0xff] %vm418, 0.0
          %421 = vst.msk [vmem:[#allocation5] sm:$0xff] %vm418, 0.0
          %p422 = scmp.eq.s32.totalorder %s27, 0
          // Predicated region
          $region53: #{tpu_custom_call.1} parent=51 // pred_check
            %p423 = pneg %p422
          $region54: #{tpu_custom_call.1} parent=51 // pred_check_branch
            %425 = sbr.rel (%p423) target = $region56
          $region55: #{tpu_custom_call.1} parent=51 // pred_region
            %v426 = vld [vmem:[%s1] sm:$0xff]
            %v427 = vld [vmem:[%s1 + $0x8] sm:$0xff]
            %v428 = vld [vmem:[%s1 + $0x10] sm:$0xff]
            %v429 = vld [vmem:[%s1 + $0x18] sm:$0xff]
            %v430 = vmul.f32 %v426, %v426
            %v431 = vmul.f32 %v427, %v427
            %v432 = vmul.f32 %v428, %v428
            %v433 = vmul.f32 %v429, %v429
            %vm434 = vcmask 64512
            %v435 = vsel %vm434, %v430, 0.0
            %v436 = vsel %vm434, %v431, 0.0
            %v437 = vadd.f32 %v435, %v436
            %v438 = vsel %vm434, %v432, 0.0
            %v439 = vadd.f32 %v437, %v438
            %v440 = vsel %vm434, %v433, 0.0
            %v441 = vadd.f32 %v439, %v440
            %v442 = vrot.slane %v441, 4
            %v443 = vadd.f32 %v441, %v442
            %v444 = vrot.slane %v443, 2
            %v445 = vadd.f32 %v443, %v444
            %v446 = vrot.slane %v445, 1
            %v447 = vadd.f32 %v445, %v446
            %v448 = vmax.f32 %v447, 1e-08
            %v449 = vrsqrt.pop %v448
            %v450 = vmul.f32 %v449, %v448
            %v451 = vmul.f32 %v450, %v449
            %v452 = vmul.f32 0.5, %v451
            %v453 = vsub.f32 1.5, %v452
            %v454 = vmul.f32 %v449, %v453
            %vm455 = vweird.f32 %v448
            %vm456 = vweird.f32 %v449
            %vm457 = vmor %vm455, %vm456
            %v458 = vsel %vm457, %v449, %v454
            %v460 = vsel %vm400, %v416, 0
            %462 = vmatpush.msra.mxu0 0.0
            %463 = vmatpush.msra.mxu0 0.0
            %464 = vmatpush.msra.mxu0 0.0
            %465 = vmatpush.msra.mxu0 0.0
            %466 = vmatpush.msra.mxu0 0.0
            %467 = vmatpush.msra.mxu0 0.0
            %468 = vmatpush.msra.mxu0 0.0
            %469 = vmatpush.msra.mxu0 0.0
            %470 = vmatpush.msra.mxu0 0.0
            %471 = vmatpush.msra.mxu0 0.0
            %472 = vmatpush.msra.mxu0 0.0
            %473 = vmatpush.msra.mxu0 0.0
            %474 = vmatpush.msra.mxu0 %v429
            %475 = vmatpush.msra.mxu0 %v428
            %476 = vmatpush.msra.mxu0 %v427
            %477 = vmatpush.msra.mxu0 %v426
            %478 = vmatmul.f32.gmra.mxu0 %v460
            %v479 = vpop.f32.mrf.mxu0
            %v480 = vadd.f32 0.0, %v479
            %481 = vdwg.mxu0
            %v482 = vmul.f32 %v480, %v458
            %v483 = vlaneseq
            %v484 = vshrl.u32 %v483, 7
            %v485 = vlaneseq
            %v486 = vand.u32 %v485, 127
            %vm487 = vcmp.ne.s32.totalorder %v484, %v486
            %v488 = vsel %vm487, %v482, -1e+30
            %v489 = vsel %vm434, %v488, -inf
            %490 = vmax.xlane.f32.xlu0 %v489
            %v491 = vpop.xlane.xlu0 %490
            %492 = vst.msk [vmem:[#allocation3] sm:$0xff] %vm418, %v491
            %v493 = vsub.f32 %v488, %v491
            %v494 = vmul.f32 %v493, 1.442695
            %v495 = vpow.pop %v494
            %v496 = vsel %vm434, %v495, 0.0
            %497 = vadd.xlane.f32.xlu0 %v496
            %v498 = vpop.xlane.xlu0 %497
            %499 = vst.msk [vmem:[#allocation4] sm:$0xff] %vm418, %v498
            %v500 = vld [vmem:[%s2] sm:$0xff]
            %v501 = vld [vmem:[%s3] sm:$0x1]
            %502 = vset.pattern.permute.xlu0 0
            %503 = vperm.xlu0 %502, %v500
            %v504 = vpop.permute.xlu0 %503
            %v505 = vperm.slane %v501, 0
            %vm506 = vcmp.eq.s32.totalorder %v504, %v505
            %vm507 = vmand %vm506, %vm487
            %v508 = vsel %vm507, %v482, 0.0
            %v509 = vsel %vm434, %v508, 0.0
            %510 = vadd.xlane.f32.xlu0 %v509
            %v511 = vpop.xlane.xlu0 %510
            %512 = vst.msk [vmem:[#allocation5] sm:$0xff] %vm418, %v511
          $region56: #{tpu_custom_call.1} parent=51 // pred_fallthru
            _
        $region52: #{tpu_custom_call.1} parent=43 // pred_fallthru
          _
        %v513 = vld [vmem:[%s327] sm:$0xff]
        %v514 = vld [vmem:[%s327 + $0x8] sm:$0xff]
        %v515 = vld [vmem:[%s327 + $0x10] sm:$0xff]
        %v516 = vld [vmem:[%s327 + $0x18] sm:$0xff]
        %v517 = vmul.f32 %v513, %v513
        %v518 = vmul.f32 %v514, %v514
        %v519 = vmul.f32 %v515, %v515
        %v520 = vmul.f32 %v516, %v516
        %v521 = vadd.f32 %v517, %v518
        %v522 = vadd.f32 %v521, %v519
        %v523 = vadd.f32 %v522, %v520
        %v524 = vrot.slane %v523, 4
        %v525 = vadd.f32 %v523, %v524
        %v526 = vrot.slane %v525, 2
        %v527 = vadd.f32 %v525, %v526
        %v528 = vrot.slane %v527, 1
        %v529 = vadd.f32 %v527, %v528
        %v530 = vmax.f32 %v529, 1e-08
        %v531 = vrsqrt.pop %v530
        %v532 = vmul.f32 %v531, %v530
        %v533 = vmul.f32 %v532, %v531
        %v534 = vmul.f32 0.5, %v533
        %v535 = vsub.f32 1.5, %v534
        %v536 = vmul.f32 %v531, %v535
        %vm537 = vweird.f32 %v530
        %vm538 = vweird.f32 %v531
        %vm539 = vmor %vm537, %vm538
        %v540 = vsel %vm539, %v531, %v536
        %v541 = vld [vmem:[#allocation2] sm:$0xff]
        %vm542 = vcmask 261120
        %v544 = vsel %vm542, %v541, 0
        %546 = vmatpush.msra.mxu0 0.0
        %547 = vmatpush.msra.mxu0 0.0
        %548 = vmatpush.msra.mxu0 0.0
        %549 = vmatpush.msra.mxu0 0.0
        %550 = vmatpush.msra.mxu0 0.0
        %551 = vmatpush.msra.mxu0 0.0
        %552 = vmatpush.msra.mxu0 0.0
        %553 = vmatpush.msra.mxu0 0.0
        %554 = vmatpush.msra.mxu0 0.0
        %555 = vmatpush.msra.mxu0 0.0
        %556 = vmatpush.msra.mxu0 0.0
        %557 = vmatpush.msra.mxu0 0.0
        %558 = vmatpush.msra.mxu0 %v516
        %559 = vmatpush.msra.mxu0 %v515
        %560 = vmatpush.msra.mxu0 %v514
        %561 = vmatpush.msra.mxu0 %v513
        %562 = vmatmul.f32.gmra.mxu0 %v544
        %v563 = vpop.f32.mrf.mxu0
        %v564 = vadd.f32 0.0, %v563
        %565 = vdwg.mxu0
        %v566 = vmul.f32 %v564, %v540
        %v567 = vlaneseq
        %v568 = vand.u32 %v567, 127
        %s569 = smul.u32 %s27, 2
        %s570 = sadd.s32 %s569, %s28
        %s571 = smul.u32 %s570, 128
        %v572 = vstv %s571
        %v573 = vadd.s32 %v568, %v572
        %vm574 = vcmp.lt.s32.totalorder %v573, 200
        %v575 = vsel %vm574, 1, 0
        %vm576 = vcmp.eq.s32.totalorder %v575, 1
        %v577 = vsel %vm576, %v566, -1e+30
        %v578 = vld [vmem:[#allocation3] sm:$0xff]
        %579 = vmax.xlane.f32.xlu0 %v577
        %v580 = vpop.xlane.xlu0 %579
        %v581 = vmax.f32 %v578, %v580
        %v582 = vsub.f32 %v578, %v581
        %v583 = vmul.f32 %v582, 1.442695
        %v584 = vpow.pop %v583
        %v585 = vld [vmem:[#allocation4] sm:$0xff]
        %v586 = vmul.f32 %v584, %v585
        %588 = vset.pattern.permute.xlu0 0
        %589 = vperm.xlu0 %588, %v581
        %v590 = vpop.permute.xlu0 %589
        %v592 = vsub.f32 %v577, %v590
        %v593 = vmul.f32 %v592, 1.442695
        %v594 = vpow.pop %v593
        %595 = vadd.xlane.f32.xlu0 %v594
        %v596 = vpop.xlane.xlu0 %595
        %v597 = vadd.f32 %v586, %v596
        %vm598 = vcmask 7168
        %599 = vst.msk [vmem:[#allocation4] sm:$0xff] %vm598, %v597
        %600 = vst.msk [vmem:[#allocation3] sm:$0xff] %vm598, %v581
        %v601 = vld [vmem:[%s2] sm:$0xff]
        %v602 = vld [vmem:[%s379] sm:$0x1]
        %603 = vset.pattern.permute.xlu0 0
        %604 = vperm.xlu0 %603, %v601
        %v605 = vpop.permute.xlu0 %604
        %v606 = vperm.slane %v602, 0
        %vm607 = vcmp.eq.s32.totalorder %v605, %v606
        %vm608 = vmand %vm607, %vm576
        %v609 = vld [vmem:[#allocation5] sm:$0xff]
        %v610 = vsel %vm608, %v566, 0.0
        %611 = vadd.xlane.f32.xlu0 %v610
        %v612 = vpop.xlane.xlu0 %611
        %v613 = vadd.f32 %v609, %v612
        %614 = vst.msk [vmem:[#allocation5] sm:$0xff] %vm598, %v613
        %p615 = scmp.eq.s32.totalorder %s28, 1
        // Predicated region
        $region57: #{tpu_custom_call.1} parent=43 // pred_check
          %p616 = pneg %p615
        $region58: #{tpu_custom_call.1} parent=43 // pred_check_branch
          %618 = sbr.rel (%p616) target = $region60
        $region59: #{tpu_custom_call.1} parent=43 // pred_region
          %v619 = vld [vmem:[#allocation3] sm:$0xff]
          %620 = vst.msk [vmem:[%s385] sm:$0xff] %vm598, %v619
          %v621 = vld [vmem:[#allocation4] sm:$0xff]
          %622 = vst.msk [vmem:[%s389] sm:$0xff] %vm598, %v621
          %v623 = vld [vmem:[#allocation5] sm:$0xff]
          %624 = vst.msk [vmem:[%s393] sm:$0xff] %vm598, %v623
        $region60: #{tpu_custom_call.1} parent=43 // pred_fallthru
          _
        %p625 = scmp.lt.s32.totalorder %s27, 0
        %s626 = scalar_select %p625, %s27, 0
        %s627 = smul.addr %s626, 8
        %s628 = scalar_lea.vmem %s6, %s627
        %p629 = scmp.lt.s32.totalorder %s27, 0
        %s630 = scalar_select %p629, %s27, 0
        %s631 = smul.addr %s630, 8
        %s632 = scalar_lea.vmem %s7, %s631
        %p633 = scmp.lt.s32.totalorder %s27, 0
        %s634 = scalar_select %p633, %s27, 0
        %s635 = smul.addr %s634, 8
        %s636 = scalar_lea.vmem %s8, %s635
        // Predicated region
        $region61: #{tpu_custom_call.1} parent=43 // pred_check
          %p637 = pneg %p197
        $region62: #{tpu_custom_call.1} parent=43 // pred_check_branch
          %639 = sbr.rel (%p637) target = $region64
        $region63: #{tpu_custom_call.1} parent=43 // pred_region
          _
        $region64: #{tpu_custom_call.1} parent=43 // pred_fallthru
          _
        // Predicated region
        $region65: #{tpu_custom_call.1} parent=43 // pred_check
          %p640 = pneg %p223
        $region66: #{tpu_custom_call.1} parent=43 // pred_check_branch
          %642 = sbr.rel (%p640) target = $region68
        $region67: #{tpu_custom_call.1} parent=43 // pred_region
          _
        $region68: #{tpu_custom_call.1} parent=43 // pred_fallthru
          _
        // Predicated region
        $region69: #{tpu_custom_call.1} parent=43 // pred_check
          %p643 = pneg %p249
        $region70: #{tpu_custom_call.1} parent=43 // pred_check_branch
          %645 = sbr.rel (%p643) target = $region72
        $region71: #{tpu_custom_call.1} parent=43 // pred_region
          _
        $region72: #{tpu_custom_call.1} parent=43 // pred_fallthru
          _
        // Predicated region
        $region73: #{tpu_custom_call.1} parent=43 // pred_check
          %p646 = pneg %p197
        $region74: #{tpu_custom_call.1} parent=43 // pred_check_branch
          %648 = sbr.rel (%p646) target = $region76
        $region75: #{tpu_custom_call.1} parent=43 // pred_region
          %p649 = scmp.lt.s32.totalorder %s27, 0
          %s650 = scalar_select %p649, %s27, 0
          %s651 = smul.addr %s650, 8
          %s652 = scalar_lea.vmem %s6, %s651
        $region76: #{tpu_custom_call.1} parent=43 // pred_fallthru
          _
        // Predicated region
        $region77: #{tpu_custom_call.1} parent=43 // pred_check
          %p653 = pneg %p223
        $region78: #{tpu_custom_call.1} parent=43 // pred_check_branch
          %655 = sbr.rel (%p653) target = $region80
        $region79: #{tpu_custom_call.1} parent=43 // pred_region
          %p656 = scmp.lt.s32.totalorder %s27, 0
          %s657 = scalar_select %p656, %s27, 0
          %s658 = smul.addr %s657, 8
          %s659 = scalar_lea.vmem %s7, %s658
        $region80: #{tpu_custom_call.1} parent=43 // pred_fallthru
          _
        // Predicated region
        $region81: #{tpu_custom_call.1} parent=43 // pred_check
          %p660 = pneg %p249
        $region82: #{tpu_custom_call.1} parent=43 // pred_check_branch
          %662 = sbr.rel (%p660) target = $region84
        $region83: #{tpu_custom_call.1} parent=43 // pred_region
          %p663 = scmp.lt.s32.totalorder %s27, 0
          %s664 = scalar_select %p663, %s27, 0
          %s665 = smul.addr %s664, 8
          %s666 = scalar_lea.vmem %s8, %s665
        $region84: #{tpu_custom_call.1} parent=43 // pred_fallthru
          _
      $region44: #{tpu_custom_call.1} parent=5 // pred_fallthru
        _
      %p667 = scmp.le.s32.totalorder 2, %s18
      // Predicated region
      $region85: #{tpu_custom_call.1} parent=5 // pred_check
        %p668 = pneg %p667
      $region86: #{tpu_custom_call.1} parent=5 // pred_check_branch
        %670 = sbr.rel (%p668) target = $region88
      $region87: #{tpu_custom_call.1} parent=5 // pred_region
        %s671 = ssub.s32 %s18, 2
      $region88: #{tpu_custom_call.1} parent=5 // pred_fallthru
        _
    $region6: #{tpu_custom_call.1} parent=1 // loop_footer
      %s22 = sadd.s32 1, %s18
    $region7: #{tpu_custom_call.1} parent=1 // loop_footer_branch
      %17 = sbr.rel target = $region3
    $region8: #{tpu_custom_call.1} parent=1 // loop_exit
      _
    %672 = vsyncpa [#allocation7], 1
    %s673 = scalar_lea.sflag [#allocation7], 1
    %674 = vsyncpa %s673, 1

</llo_original>
